<compile_context>
chip_gen: v7x
topology: tpu7x:2x2x1
jax: 0.10.0
libtpu: 0.0.40
codegen_flags: <defaults>
</compile_context>

<pallas_src>
import jax
import jax.numpy as jnp
from jax.experimental import pallas as pl
from jax.experimental.pallas import tpu as pltpu


def _make_attention_kernel(s_true, s_pad):
    """Builds the kernel with the true / padded sequence lengths baked in."""

    def kernel(x_ref, w_ref, b_ref, q_ref, o_ref):
        # x_ref: (TB, Sp, Dp)  w_ref: (Dp, Ap)  b_ref/q_ref: (1, Ap)  o_ref: (TB, Dp)
        TB, Sp, Dp = x_ref.shape
        Ap = w_ref.shape[1]

        x = x_ref[...]                          # (TB, Sp, Dp), compute dtype
        x2 = x.reshape(TB * Sp, Dp)             # layout-preserving (Sp sublane-aligned)

        # Hidden projection + tanh; MXU matmul with f32 accumulation.
        temp = jnp.tanh(
            jnp.dot(x2, w_ref[...], preferred_element_type=jnp.float32)
            + b_ref[...]
        )                                       # (TB*Sp, Ap) f32

        # Additive attention scores: VPU multiply + lane reduce (no M=1 matmul).
        temp3 = temp.reshape(TB, Sp, Ap)
        scores = jnp.sum(temp3 * q_ref[...], axis=-1)        # (TB, Sp) f32

        # Mask padded sequence positions (zero-padded x rows must get 0 weight).
        if s_pad != s_true:
            pos = jax.lax.broadcasted_iota(jnp.int32, (TB, s_pad), 1)
            scores = jnp.where(pos < s_true, scores, -jnp.inf)

        # Numerically stable softmax over the sequence axis.
        m = jnp.max(scores, axis=-1, keepdims=True)           # (TB, 1)
        e = jnp.exp(scores - m)                                # (TB, Sp)
        att = e * pl.reciprocal(jnp.sum(e, axis=-1, keepdims=True), approx=False)

        # Weighted sum over the sequence on the VPU; bf16*f32 promotes to f32,
        # so accumulation is f32 without materializing an f32 copy of x.
        out = jnp.sum(att[:, :, None] * x, axis=1)             # (TB, Dp) f32
        o_ref[...] = out.astype(o_ref.dtype)

    return kernel


def _round_up(v, m):
    return ((v + m - 1) // m) * m


def additive_attention(
    x, w, b, q, *,
    compute_dtype=jnp.bfloat16,
    target_block_bytes=2 << 20,      # ~2 MiB streamed x tile per buffer
    vmem_limit_bytes=32 << 20,       # raise v5e's 16 MiB scoped default
):
    """x: (B, S, D); w: (D, A); b: (A,); q: (A,). Returns (B, D) in x.dtype."""
    B, S, D = x.shape
    A = w.shape[1]
    out_dtype = x.dtype

    # --- Padded shapes: lane-dense D/A, sublane-aligned S -------------------
    lane = 128
    sub = 16 if jnp.dtype(compute_dtype) == jnp.dtype(jnp.bfloat16) else 8
    Dp = _round_up(D, lane)
    Ap = _round_up(A, lane)
    Sp = _round_up(S, sub)

    xc = x.astype(compute_dtype)
    if (Sp, Dp) != (S, D):
        xc = jnp.pad(xc, ((0, 0), (0, Sp - S), (0, Dp - D)))
    wc = w.astype(compute_dtype)
    if (Dp, Ap) != (D, A):
        wc = jnp.pad(wc, ((0, Dp - D), (0, Ap - A)))
    b2 = jnp.pad(b.astype(jnp.float32), (0, Ap - A)).reshape(1, Ap)
    q2 = jnp.pad(q.astype(jnp.float32), (0, Ap - A)).reshape(1, Ap)

    # --- Batch tile from VMEM budget ---------------------------------------
    itemsize = jnp.dtype(compute_dtype).itemsize
    per_row_bytes = Sp * Dp * itemsize
    tb = max(1, int(target_block_bytes // per_row_bytes))
    if tb >= B:
        if B >= 16:
            # Prefer >= 2 (roughly balanced) blocks so the "parallel" grid axis
            # can shard across v7x's two TensorCores.
            half = _round_up(-(-B // 2), 8)
            tb = half if half < B else B
        else:
            tb = B
    else:
        tb = max(8, (tb // 8) * 8)   # keep (tb, Dp) output block layout-legal

    n_blocks = -(-B // tb)
    Bp = n_blocks * tb
    if Bp != B:
        # Zero-padded batch rows produce finite garbage that we slice off.
        xc = jnp.pad(xc, ((0, Bp - B), (0, 0), (0, 0)))

    cost = pl.CostEstimate(
        flops=2 * Bp * Sp * Dp * Ap + 2 * Bp * Sp * Ap + 2 * Bp * Sp * Dp,
        transcendentals=Bp * Sp * (Ap + 1),        # tanh + exp
        bytes_accessed=(Bp * Sp * Dp * itemsize + Dp * Ap * itemsize
                        + 2 * Ap * 4 + Bp * Dp * jnp.dtype(out_dtype).itemsize),
    )

    kernel = _make_attention_kernel(S, Sp)

    out = pl.pallas_call(
        kernel,
        out_shape=jax.ShapeDtypeStruct((Bp, Dp), out_dtype),
        grid_spec=pltpu.PrefetchScalarGridSpec(
            num_scalar_prefetch=0,
            grid=(n_blocks,),
            in_specs=[
                pl.BlockSpec((tb, Sp, Dp), lambda i: (i, 0, 0)),  # streamed x tile
                pl.BlockSpec((Dp, Ap), lambda i: (0, 0)),         # resident weight
                pl.BlockSpec((1, Ap), lambda i: (0, 0)),          # bias
                pl.BlockSpec((1, Ap), lambda i: (0, 0)),          # query (lane-dense)
            ],
            out_specs=pl.BlockSpec((tb, Dp), lambda i: (i, 0)),
        ),
        compiler_params=pltpu.CompilerParams(
            dimension_semantics=("parallel",),
            vmem_limit_bytes=vmem_limit_bytes,
        ),
        cost_estimate=cost,
    )(xc, wc, b2, q2)
    return out[:B, :D]


def reference_attention(x, w, b, q):
    temp = jnp.tanh(jnp.einsum("bsd,da->bsa", x, w) + b)
    scores = jnp.einsum("bsa,a->bs", temp, q)
    att = jax.nn.softmax(scores, axis=1)
    return jnp.einsum("bs,bsd->bd", att, x)


if __name__ == "__main__":
    # Small shapes consistent with the module.
    B, S = 2, 8          # batch, sequence length
    input_dim = 32       # D
    attention_dim = 16   # A

    key = jax.random.PRNGKey(0)
    kx, kq, kw, kb = jax.random.split(key, 4)

    x = jax.random.normal(kx, (B, S, input_dim), dtype=jnp.float32)

    # Deterministic parameter init (mirrors the PyTorch __init__ shapes):
    #   q ~ U(-0.1, 0.1); Linear(input_dim, attention_dim) ~ U(-1/sqrt(D), 1/sqrt(D))
    q = jax.random.uniform(kq, (attention_dim,), minval=-0.1, maxval=0.1,
                           dtype=jnp.float32)
    bound = 1.0 / jnp.sqrt(jnp.float32(input_dim))
    w = jax.random.uniform(kw, (input_dim, attention_dim),
                           minval=-bound, maxval=bound, dtype=jnp.float32)
    b = jax.random.uniform(kb, (attention_dim,),
                           minval=-bound, maxval=bound, dtype=jnp.float32)

    ref = reference_attention(x, w, b, q)

    # 1) f32 compute path: tight parity with the reference.
    out_f32 = jax.block_until_ready(
        additive_attention(x, w, b, q, compute_dtype=jnp.float32))
    assert out_f32.shape == (B, input_dim)
    assert jnp.allclose(out_f32, ref, atol=1e-4, rtol=1e-4), "f32 mismatch vs reference"

    # 2) Default bf16 streaming path (exercises D/A/S padding + seq mask).
    out_bf16 = jax.block_until_ready(additive_attention(x, w, b, q))
    assert out_bf16.shape == (B, input_dim)
    assert jnp.allclose(out_bf16, ref, atol=5e-2, rtol=5e-2), "bf16 mismatch vs reference"

    # 3) Larger batch exercising the multi-block parallel grid + batch padding.
    B2 = 20
    x2 = jax.random.normal(jax.random.PRNGKey(1), (B2, S, input_dim),
                           dtype=jnp.float32)
    ref2 = reference_attention(x2, w, b, q)
    out2 = jax.block_until_ready(additive_attention(x2, w, b, q))
    assert out2.shape == (B2, input_dim)
    assert jnp.allclose(out2, ref2, atol=5e-2, rtol=5e-2), "bf16 batched mismatch vs reference"

    print("KERNEL_OK")
</pallas_src>

<mosaic_0001>
module attributes {stable_mosaic.version = 11 : i64} {
  func.func @kernel(%arg0: i32, %arg1: memref<2x8x128xf32, #tpu.memory_space<vmem>>, %arg2: memref<128x128xf32, #tpu.memory_space<vmem>>, %arg3: memref<1x128xf32, #tpu.memory_space<vmem>>, %arg4: memref<1x128xf32, #tpu.memory_space<vmem>>, %arg5: memref<2x128xf32, #tpu.memory_space<vmem>>) attributes {dimension_semantics = [#tpu.dimension_semantics<parallel>], iteration_bounds = array<i64: 1>, scalar_prefetch = 0 : i64, scratch_operands = 0 : i64, tpu.core_type = #tpu.core_type<tc>, window_params = [{transform_indices = @transform_0, window_bounds = array<i64: 2, 8, 128>}, {pipeline_mode = #tpu.pipeline_mode<synchronous>, transform_indices = @transform_1, window_bounds = array<i64: 128, 128>}, {pipeline_mode = #tpu.pipeline_mode<synchronous>, transform_indices = @transform_2, window_bounds = array<i64: 1, 128>}, {pipeline_mode = #tpu.pipeline_mode<synchronous>, transform_indices = @transform_3, window_bounds = array<i64: 1, 128>}, {transform_indices = @transform_4, window_bounds = array<i64: 2, 128>}]} {
    %c0 = arith.constant 0 : index
    %c0_0 = arith.constant 0 : index
    %c0_1 = arith.constant 0 : index
    %0 = vector.load %arg1[%c0, %c0_0, %c0_1] : memref<2x8x128xf32, #tpu.memory_space<vmem>>, vector<2x8x128xf32>
    %1 = vector.shape_cast %0 : vector<2x8x128xf32> to vector<16x128xf32>
    %c0_2 = arith.constant 0 : index
    %c0_3 = arith.constant 0 : index
    %2 = vector.load %arg2[%c0_2, %c0_3] : memref<128x128xf32, #tpu.memory_space<vmem>>, vector<128x128xf32>
    %cst = arith.constant dense<0.000000e+00> : vector<16x128xf32>
    %3 = tpu.matmul %1, %2, %cst {dimension_numbers = #tpu.dot_dimension_numbers<[1], [0], [0], [1], [0, 0, 1, 1], [], []>} : vector<16x128xf32>, vector<128x128xf32>, vector<16x128xf32> -> vector<16x128xf32>
    %c0_4 = arith.constant 0 : index
    %c0_5 = arith.constant 0 : index
    %4 = vector.load %arg3[%c0_4, %c0_5] : memref<1x128xf32, #tpu.memory_space<vmem>>, vector<1x128xf32>
    %5 = vector.broadcast %4 : vector<1x128xf32> to vector<16x128xf32>
    %6 = arith.addf %3, %5 : vector<16x128xf32>
    %7 = math.tanh %6 : vector<16x128xf32>
    %8 = vector.shape_cast %7 : vector<16x128xf32> to vector<2x8x128xf32>
    %c0_6 = arith.constant 0 : index
    %c0_7 = arith.constant 0 : index
    %9 = vector.load %arg4[%c0_6, %c0_7] : memref<1x128xf32, #tpu.memory_space<vmem>>, vector<1x128xf32>
    %10 = vector.shape_cast %9 : vector<1x128xf32> to vector<1x1x128xf32>
    %11 = vector.broadcast %10 : vector<1x1x128xf32> to vector<2x8x128xf32>
    %12 = arith.mulf %8, %11 : vector<2x8x128xf32>
    %cst_8 = arith.constant dense<0.000000e+00> : vector<2x8xf32>
    %13 = vector.multi_reduction <add>, %12, %cst_8 [2] : vector<2x8x128xf32> to vector<2x8xf32>
    %cst_9 = arith.constant dense<0xFF800000> : vector<2xf32>
    %14 = vector.multi_reduction <maximumf>, %13, %cst_9 [1] : vector<2x8xf32> to vector<2xf32>
    %15 = vector.shape_cast %14 : vector<2xf32> to vector<2x1xf32>
    %16 = vector.broadcast %15 : vector<2x1xf32> to vector<2x8xf32>
    %17 = arith.subf %13, %16 : vector<2x8xf32>
    %18 = math.exp %17 : vector<2x8xf32>
    %cst_10 = arith.constant dense<0.000000e+00> : vector<2xf32>
    %19 = vector.multi_reduction <add>, %18, %cst_10 [1] : vector<2x8xf32> to vector<2xf32>
    %20 = vector.shape_cast %19 : vector<2xf32> to vector<2x1xf32>
    %21 = tpu.reciprocal %20 : vector<2x1xf32> -> vector<2x1xf32>
    %22 = vector.broadcast %21 : vector<2x1xf32> to vector<2x8xf32>
    %23 = arith.mulf %18, %22 : vector<2x8xf32>
    %24 = vector.shape_cast %23 : vector<2x8xf32> to vector<2x8x1xf32>
    %25 = vector.broadcast %24 : vector<2x8x1xf32> to vector<2x8x128xf32>
    %26 = arith.mulf %25, %0 : vector<2x8x128xf32>
    %cst_11 = arith.constant dense<0.000000e+00> : vector<2x128xf32>
    %27 = vector.multi_reduction <add>, %26, %cst_11 [1] : vector<2x8x128xf32> to vector<2x128xf32>
    %c0_12 = arith.constant 0 : index
    %c0_13 = arith.constant 0 : index
    %28 = vector.load %arg5[%c0_12, %c0_13] : memref<2x128xf32, #tpu.memory_space<vmem>>, vector<2x128xf32>
    tpu.vector_store %arg5[%c0_12, %c0_13], %27 {strides = array<i32>} : memref<2x128xf32, #tpu.memory_space<vmem>>, vector<2x128xf32>,
    return
  }
  func.func @transform_0(%arg0: i32) -> (i32, i32, i32) {
    %c0_i32 = arith.constant 0 : i32
    %c0_i32_0 = arith.constant 0 : i32
    %c0_i32_1 = arith.constant 0 : i32
    return %arg0, %c0_i32, %c0_i32_0 : i32, i32, i32
  }
  func.func @transform_1(%arg0: i32) -> (i32, i32) {
    %c0_i32 = arith.constant 0 : i32
    %c0_i32_0 = arith.constant 0 : i32
    %c0_i32_1 = arith.constant 0 : i32
    return %c0_i32, %c0_i32_0 : i32, i32
  }
  func.func @transform_2(%arg0: i32) -> (i32, i32) {
    %c0_i32 = arith.constant 0 : i32
    %c0_i32_0 = arith.constant 0 : i32
    %c0_i32_1 = arith.constant 0 : i32
    return %c0_i32, %c0_i32_0 : i32, i32
  }
  func.func @transform_3(%arg0: i32) -> (i32, i32) {
    %c0_i32 = arith.constant 0 : i32
    %c0_i32_0 = arith.constant 0 : i32
    %c0_i32_1 = arith.constant 0 : i32
    return %c0_i32, %c0_i32_0 : i32, i32
  }
  func.func @transform_4(%arg0: i32) -> (i32, i32) {
    %c0_i32 = arith.constant 0 : i32
    %c0_i32_0 = arith.constant 0 : i32
    return %arg0, %c0_i32 : i32, i32
  }
}

</mosaic_0001>

<llo_original>
// kernel: tpu_custom_call.1
$region0: #{tpu_custom_call.1}
  #allocation0 [shape = 'u32[]', space=smem, size = 0x4, offset = 0x4, fixed_abs, tag = 'smem constant byte address 0x4 - core index']
  #allocation1 [shape = 'u32[144,128]{1,0:T(1,128)}', space=vmem, size = 0x12000, scoped, tag = 'internal scratch']
  %s0 = inlined_call_operand.hbm [shape: f32[2,8,128], index: 0, kind: input, shape index: {}]
  %s1 = inlined_call_operand.hbm [shape: f32[128,128], index: 1, kind: input, shape index: {}]
  %s2 = inlined_call_operand.vmem [shape: f32[1,128], index: 2, kind: input, shape index: {}]
  %s3 = inlined_call_operand.vmem [shape: f32[1,128], index: 3, kind: input, shape index: {}]
  %s4 = inlined_call_operand.hbm [shape: f32[2,128], index: 4, kind: output, shape index: {}]
  %s5 = sld [smem:[#allocation0]]
  $region34: #{tpu_custom_call.1} parent=0
    _
  %s7 = ssub.s32 1, %s5
  %s8 = scalar_select 0, %s7, %s5
  $region1: #{tpu_custom_call.1} parent=0
    #allocation2 [shape = 'u8[8192]{0}', space=vmem, size = 0x2000, scoped, tag = 'input window, operand 0, single buffered']
    #allocation3 [shape = 's32[1]{0}', space=sflag, size = 0x4, scoped, tag = 'scoped memory for tpu_custom_call.1']
    #allocation4 [shape = 's32[1]{0}', space=sflag, size = 0x4, scoped, tag = 'scoped memory for tpu_custom_call.1']
    #allocation5 [shape = 'u8[65536]{0}', space=vmem, size = 0x10000, scoped, tag = 'input window, operand 1, single buffered']
    #allocation6 [shape = 's32[1]{0}', space=sflag, size = 0x4, scoped, tag = 'scoped memory for tpu_custom_call.1']
    #allocation7 [shape = 'u8[1024]{0}', space=vmem, size = 0x400, scoped, tag = 'output window, operand 0, single buffered']
    %9 = vsyncpa [#allocation3], 0
    %10 = vsyncpa [#allocation6], 0
    %11 = vsyncpa [#allocation4], 0
    // Predicated region
    $region2: #{tpu_custom_call.1} parent=1 // pred_check
      _
    $region3: #{tpu_custom_call.1} parent=1 // pred_check_branch
      %13 = sbr.rel (0) target = $region5
    $region4: #{tpu_custom_call.1} parent=1 // pred_region
      %s15 = ssub.s32 256, 256
      %16 = vsyncadd [#allocation3], %s15
      %s17 = sshll.u32 [#allocation2], 4
      %s18 = int_to_ptr.vmem [resolvable:$true] %s17
      %23 = dma.hbm_to_vmem [thread:$0]  %s0, 256, %s18, [#allocation3], 128, 128, 8
    $region5: #{tpu_custom_call.1} parent=1 // pred_fallthru
      _
    // Predicated region
    $region6: #{tpu_custom_call.1} parent=1 // pred_check
      _
    $region7: #{tpu_custom_call.1} parent=1 // pred_check_branch
      %25 = sbr.rel (0) target = $region9
    $region8: #{tpu_custom_call.1} parent=1 // pred_region
      %s27 = ssub.s32 2048, 2048
      %28 = vsyncadd [#allocation6], %s27
      %s29 = sshll.u32 [#allocation5], 4
      %s30 = int_to_ptr.vmem [resolvable:$true] %s29
      %35 = dma.hbm_to_vmem [thread:$0]  %s1, 2048, %s30, [#allocation6], 128, 128, 8
    $region9: #{tpu_custom_call.1} parent=1 // pred_fallthru
      _
    // Predicated region
    $region10: #{tpu_custom_call.1} parent=1 // pred_check
      _
    $region11: #{tpu_custom_call.1} parent=1 // pred_check_branch
      %37 = sbr.rel (0) target = $region13
    $region12: #{tpu_custom_call.1} parent=1 // pred_region
      _
    $region13: #{tpu_custom_call.1} parent=1 // pred_fallthru
      _
    // Predicated region
    $region14: #{tpu_custom_call.1} parent=1 // pred_check
      _
    $region15: #{tpu_custom_call.1} parent=1 // pred_check_branch
      %39 = sbr.rel (0) target = $region17
    $region16: #{tpu_custom_call.1} parent=1 // pred_region
      _
    $region17: #{tpu_custom_call.1} parent=1 // pred_fallthru
      _
    // Predicated region
    $region18: #{tpu_custom_call.1} parent=1 // pred_check
      _
    $region19: #{tpu_custom_call.1} parent=1 // pred_check_branch
      %41 = sbr.rel (0) target = $region21
    $region20: #{tpu_custom_call.1} parent=1 // pred_region
      %42 = dma.done [#allocation3], 256
    $region21: #{tpu_custom_call.1} parent=1 // pred_fallthru
      _
    // Predicated region
    $region22: #{tpu_custom_call.1} parent=1 // pred_check
      _
    $region23: #{tpu_custom_call.1} parent=1 // pred_check_branch
      %44 = sbr.rel (0) target = $region25
    $region24: #{tpu_custom_call.1} parent=1 // pred_region
      %45 = dma.done [#allocation6], 2048
    $region25: #{tpu_custom_call.1} parent=1 // pred_fallthru
      _
    %v46 = vld [vmem:[#allocation2] sm:$0xff]
    %v47 = vld [vmem:[#allocation2 + $0x8] sm:$0xff]
    %v48 = vld [vmem:[#allocation5] sm:$0xff]
    %v49 = vld [vmem:[#allocation5 + $0x8] sm:$0xff]
    %v50 = vld [vmem:[#allocation5 + $0x10] sm:$0xff]
    %v51 = vld [vmem:[#allocation5 + $0x18] sm:$0xff]
    %v52 = vld [vmem:[#allocation5 + $0x20] sm:$0xff]
    %v53 = vld [vmem:[#allocation5 + $0x28] sm:$0xff]
    %v54 = vld [vmem:[#allocation5 + $0x30] sm:$0xff]
    %v55 = vld [vmem:[#allocation5 + $0x38] sm:$0xff]
    %v56 = vld [vmem:[#allocation5 + $0x40] sm:$0xff]
    %v57 = vld [vmem:[#allocation5 + $0x48] sm:$0xff]
    %v58 = vld [vmem:[#allocation5 + $0x50] sm:$0xff]
    %v59 = vld [vmem:[#allocation5 + $0x58] sm:$0xff]
    %v60 = vld [vmem:[#allocation5 + $0x60] sm:$0xff]
    %v61 = vld [vmem:[#allocation5 + $0x68] sm:$0xff]
    %v62 = vld [vmem:[#allocation5 + $0x70] sm:$0xff]
    %v63 = vld [vmem:[#allocation5 + $0x78] sm:$0xff]
    %v64 = vld [vmem:[%s2] sm:$0x1]
    %v66 = vlaneseq
    %v67 = vshrl.u32 %v66, 7
    %v68 = vsub.s32 0, %v67
    %v69 = vrot.slane %v64, %v68
    %71 = vmatprep.subr.mxu0 0.0
    %72 = vmatpush1.msra.mxu0 %v48
    %73 = vmatprep.subr.mxu0 0.0
    %74 = vmatpush1.msra.mxu0 %v49
    %75 = vmatprep.subr.mxu0 0.0
    %76 = vmatpush1.msra.mxu0 %v50
    %77 = vmatprep.subr.mxu0 0.0
    %78 = vmatpush1.msra.mxu0 %v51
    %79 = vmatprep.subr.mxu0 0.0
    %80 = vmatpush1.msra.mxu0 %v52
    %81 = vmatprep.subr.mxu0 0.0
    %82 = vmatpush1.msra.mxu0 %v53
    %83 = vmatprep.subr.mxu0 0.0
    %84 = vmatpush1.msra.mxu0 %v54
    %85 = vmatprep.subr.mxu0 0.0
    %86 = vmatpush1.msra.mxu0 %v55
    %87 = vmatprep.subr.mxu0 0.0
    %88 = vmatpush1.msra.mxu0 %v56
    %89 = vmatprep.subr.mxu0 0.0
    %90 = vmatpush1.msra.mxu0 %v57
    %91 = vmatprep.subr.mxu0 0.0
    %92 = vmatpush1.msra.mxu0 %v58
    %93 = vmatprep.subr.mxu0 0.0
    %94 = vmatpush1.msra.mxu0 %v59
    %95 = vmatprep.subr.mxu0 0.0
    %96 = vmatpush1.msra.mxu0 %v60
    %97 = vmatprep.subr.mxu0 0.0
    %98 = vmatpush1.msra.mxu0 %v61
    %99 = vmatprep.subr.mxu0 0.0
    %100 = vmatpush1.msra.mxu0 %v62
    %101 = vmatprep.subr.mxu0 0.0
    %102 = vmatpush1.msra.mxu0 %v63
    %103 = vmatprep.subr.mxu0 0.0
    %104 = vmatpush1.msra.mxu0 0.0
    %105 = vmatprep.subr.mxu0 0.0
    %106 = vmatpush1.msra.mxu0 0.0
    %107 = vmatprep.subr.mxu0 0.0
    %108 = vmatpush1.msra.mxu0 0.0
    %109 = vmatprep.subr.mxu0 0.0
    %110 = vmatpush1.msra.mxu0 0.0
    %111 = vmatprep.subr.mxu0 0.0
    %112 = vmatpush1.msra.mxu0 0.0
    %113 = vmatprep.subr.mxu0 0.0
    %114 = vmatpush1.msra.mxu0 0.0
    %115 = vmatprep.subr.mxu0 0.0
    %116 = vmatpush1.msra.mxu0 0.0
    %117 = vmatprep.subr.mxu0 0.0
    %118 = vmatpush1.msra.mxu0 0.0
    %119 = vmatprep.subr.mxu0 0.0
    %120 = vmatpush1.msra.mxu0 0.0
    %121 = vmatprep.subr.mxu0 0.0
    %122 = vmatpush1.msra.mxu0 0.0
    %123 = vmatprep.subr.mxu0 0.0
    %124 = vmatpush1.msra.mxu0 0.0
    %125 = vmatprep.subr.mxu0 0.0
    %126 = vmatpush1.msra.mxu0 0.0
    %127 = vmatprep.subr.mxu0 0.0
    %128 = vmatpush1.msra.mxu0 0.0
    %129 = vmatprep.subr.mxu0 0.0
    %130 = vmatpush1.msra.mxu0 0.0
    %131 = vmatprep.subr.mxu0 0.0
    %132 = vmatpush1.msra.mxu0 0.0
    %133 = vmatprep.subr.mxu0 0.0
    %134 = vmatpush1.msra.mxu0 0.0
    %135 = vmatprep.mubr.f32.mxu0 0.0
    %136 = vmatmul.mubr.f32.gmra.mrb[0].mxu0 %v46
    %v137 = vpop.f32.mrb[0].mxu0
    %v138 = vadd.f32 %v69, %v137
    %v139 = vpop.f32.mrb[0].mxu0
    %140 = vmatprep.mubr.f32.mxu0 0.0
    %141 = vmatmul.mubr.f32.gmra.mrb[0].mxu0 %v47
    %v142 = vpop.f32.mrb[0].mxu0
    %v143 = vadd.f32 %v69, %v142
    %v144 = vpop.f32.mrb[0].mxu0
    %145 = vdwg.mxu0
    %v146 = vtanh.pop %v138
    %v147 = vtanh.pop %v143
    %v148 = vld [vmem:[%s3] sm:$0x1]
    %v150 = vlaneseq
    %v151 = vshrl.u32 %v150, 7
    %v152 = vsub.s32 0, %v151
    %v153 = vrot.slane %v148, %v152
    %v155 = vmul.f32 %v146, %v153
    %v156 = vmul.f32 %v147, %v153
    %157 = vadd.xlane.f32.xlu0 %v155
    %v158 = vpop.xlane.xlu0 %157
    %159 = vadd.xlane.f32.xlu0 %v156
    %v160 = vpop.xlane.xlu0 %159
    %v163 = vlaneseq
    %v164 = vand.u32 %v163, 127
    %v165 = vlaneseq
    %v166 = vshrl.u32 %v165, 7
    %v167 = vsub.s32 %v164, %v166
    %v168 = vrot.slane %v158, %v167
    %v169 = vlaneseq
    %v170 = vshrl.u32 %v169, 7
    %v171 = vsub.s32 %v164, %v170
    %v172 = vrot.slane %v160, %v171
    %vm173 = vcmask 1041409
    %v174 = vsel %vm173, %v172, %v168
    %vm176 = vcmask 58368
    %v177 = vsel %vm176, %v174, -inf
    %178 = vmax.xlane.f32.xlu0 %v177
    %v179 = vpop.xlane.xlu0 %178
    %v181 = vlaneseq
    %v182 = vshrl.u32 %v181, 7
    %v183 = vsub.s32 0, %v182
    %v184 = vrot.slane %v179, %v183
    %v185 = vlaneseq
    %v186 = vshrl.u32 %v185, 7
    %v187 = vsub.s32 1, %v186
    %v188 = vrot.slane %v179, %v187
    %v191 = vsub.f32 %v158, %v184
    %v192 = vsub.f32 %v160, %v188
    %v193 = vmul.f32 %v191, 1.442695
    %v194 = vpow.pop %v193
    %v195 = vmul.f32 %v192, 1.442695
    %v196 = vpow.pop %v195
    %199 = vset.pattern.permute.xlu0 0
    %200 = vperm.xlu0 %199, %v194
    %v201 = vpop.permute.xlu0 %200
    %202 = vset.pattern.permute.xlu0 0
    %203 = vperm.xlu0 %202, %v196
    %v204 = vpop.permute.xlu0 %203
    %v205 = vlaneseq
    %v206 = vshrl.u32 %v205, 7
    %v207 = vsub.s32 %v164, %v206
    %v208 = vrot.slane %v201, %v207
    %v209 = vlaneseq
    %v210 = vshrl.u32 %v209, 7
    %v211 = vsub.s32 %v164, %v210
    %v212 = vrot.slane %v204, %v211
    %v213 = vsel %vm173, %v212, %v208
    %v215 = vsel %vm176, %v213, 0.0
    %216 = vadd.xlane.f32.xlu0 %v215
    %v217 = vpop.xlane.xlu0 %216
    %v218 = vrcp.pop %v217
    %v220 = vlaneseq
    %v221 = vshrl.u32 %v220, 7
    %v222 = vsub.s32 0, %v221
    %v223 = vrot.slane %v218, %v222
    %v224 = vlaneseq
    %v225 = vshrl.u32 %v224, 7
    %v226 = vsub.s32 1, %v225
    %v227 = vrot.slane %v218, %v226
    %v230 = vmul.f32 %v194, %v223
    %v231 = vmul.f32 %v196, %v227
    %233 = vset.pattern.permute.xlu0 0
    %234 = vperm.xlu0 %233, %v230
    %v235 = vpop.permute.xlu0 %234
    %238 = vset.pattern.permute.xlu0 0
    %239 = vperm.xlu0 %238, %v231
    %v240 = vpop.permute.xlu0 %239
    %v242 = vmul.f32 %v235, %v46
    %v243 = vmul.f32 %v240, %v47
    %v244 = vrot.slane %v242, 4
    %v245 = vadd.f32 %v242, %v244
    %v246 = vrot.slane %v245, 2
    %v247 = vadd.f32 %v245, %v246
    %v248 = vrot.slane %v247, 1
    %v249 = vadd.f32 %v247, %v248
    %v250 = vrot.slane %v243, 4
    %v251 = vadd.f32 %v243, %v250
    %v252 = vrot.slane %v251, 2
    %v253 = vadd.f32 %v251, %v252
    %v254 = vrot.slane %v253, 1
    %v255 = vadd.f32 %v253, %v254
    %v258 = vsel %vm173, %v255, %v249
    %260 = vst [vmem:[#allocation7] sm:$0x3] %v258
    // Predicated region
    $region26: #{tpu_custom_call.1} parent=1 // pred_check
      _
    $region27: #{tpu_custom_call.1} parent=1 // pred_check_branch
      %262 = sbr.rel (0) target = $region29
    $region28: #{tpu_custom_call.1} parent=1 // pred_region
      %s264 = ssub.s32 32, 32
      %265 = vsyncadd [#allocation4], %s264
      %s267 = sshll.u32 [#allocation7], 4
      %s268 = int_to_ptr.vmem [resolvable:$true] %s267
      %270 = dma.vmem_to_hbm [thread:$0]  %s268, 32, %s4, [#allocation4]
    $region29: #{tpu_custom_call.1} parent=1 // pred_fallthru
      _
    // Predicated region
    $region30: #{tpu_custom_call.1} parent=1 // pred_check
      _
    $region31: #{tpu_custom_call.1} parent=1 // pred_check_branch
      %272 = sbr.rel (0) target = $region33
    $region32: #{tpu_custom_call.1} parent=1 // pred_region
      %273 = dma.done [#allocation4], 32
    $region33: #{tpu_custom_call.1} parent=1 // pred_fallthru
      _
    %274 = vsyncpa [#allocation3], 1
    %275 = vsyncpa [#allocation6], 1
    %276 = vsyncpa [#allocation4], 1

</llo_original>
